<compile_context>
chip_gen: v7x
topology: tpu7x:2x2x1
jax: 0.10.0
libtpu: 0.0.40
codegen_flags: <defaults>
</compile_context>

<pallas_src>
import math
from typing import NamedTuple

import numpy as np
import jax
import jax.numpy as jnp
from jax.experimental import pallas as pl
from jax.experimental.pallas import tpu as pltpu


# ----------------------------------------------------------------------------
# Chip / generation info (trace-time query, safe fallbacks)
# ----------------------------------------------------------------------------
def _chip_info():
    """(vmem_capacity_bytes, mxu_width, num_tensorcores)."""
    vmem = 64 << 20                       # conservative fallback (v7x-sized)
    try:
        vmem = int(pltpu.get_tpu_info().vmem_capacity_bytes)
    except Exception:
        pass
    kind = ""
    try:
        kind = jax.devices()[0].device_kind.lower()
    except Exception:
        pass
    mxu = 128 if "v5" in kind else 256    # v5e MXU is 4x128^2; v6e/v7x 2x256^2
    num_tc = 2 if "v7" in kind else 1     # v7x has 2 TensorCores per chip
    return vmem, mxu, num_tc


# ----------------------------------------------------------------------------
# Tile sizing
# ----------------------------------------------------------------------------
def _largest_div_tile(dim, align, cap):
    """Largest multiple of `align` that divides `dim` and is <= cap; `dim`
    itself (always a legal full-extent block) if dim <= cap or no aligned
    divisor exists."""
    if dim <= cap:
        return dim
    t = (cap // align) * align
    while t >= align:
        if dim % t == 0:
            return t
        t -= align
    return dim


def _choose_tiles(M, Kg, Ng, x_b, w_b, o_b, vmem_budget, num_tc, n_groups):
    """Pick (tm, tk, tn) under a VMEM working-set budget, then make sure at
    least `num_tc` blocks exist on the parallel axes (v7x megacore)."""
    big = vmem_budget >= (40 << 20)       # 128 MiB parts (v5e/v6e) vs v7x
    cap_m = 512
    cap_k = 2048 if big else 512
    cap_n = 1024 if big else 512

    def pick():
        tm = _largest_div_tile(M, 8, cap_m)
        tk = _largest_div_tile(Kg, 128, cap_k)
        tn = _largest_div_tile(Ng, 128, cap_n)
        return tm, tk, tn

    def working_set(tm, tk, tn):
        nk = -(-Kg // tk)
        acc = tm * tn * 4 if nk > 1 else 0
        return (2 * (tm * tk * x_b + tk * tn * w_b + tn * 4)
                + 2 * tm * tn * o_b + acc)

    tm, tk, tn = pick()
    while working_set(tm, tk, tn) > vmem_budget:
        if cap_k > 128:
            cap_k //= 2
        elif cap_n > 128:
            cap_n //= 2
        elif cap_m > 8:
            cap_m //= 2
        else:
            break                          # indivisible full-dim tiles: accept
        tm, tk, tn = pick()

    # v7x: guarantee >=2 blocks on some "parallel" grid axis (2 TensorCores).
    def parallel_blocks(tm_, tn_):
        return n_groups * (-(-M // tm_)) * (-(-Ng // tn_))

    while num_tc > 1 and parallel_blocks(tm, tn) < num_tc:
        if tn % 256 == 0 and Ng % (tn // 2) == 0:
            tn //= 2
        elif tm % 16 == 0 and M % (tm // 2) == 0:
            tm //= 2
        else:
            break
    return tm, tk, tn


# ----------------------------------------------------------------------------
# Kernels (shared by the packed and grouped paths)
# ----------------------------------------------------------------------------
def _mm_bias_acc_kernel(x_ref, w_ref, b_ref, o_ref, acc_ref):
    # x: (tm, tk)  w: (tk, tn)  b: (1, tn) f32  o: (tm, tn)  acc: (tm, tn) f32
    k = pl.program_id(3)

    @pl.when(k == 0)
    def _():
        acc_ref[...] = jnp.zeros_like(acc_ref)

    x = x_ref[...]
    w = w_ref[...]
    if x.dtype != w.dtype:                       # in-kernel cast (VPU, hidden
        x = x.astype(w.dtype)                    # under MXU slack)
    acc_ref[...] += jnp.dot(x, w, preferred_element_type=jnp.float32)

    @pl.when(k == pl.num_programs(3) - 1)
    def _():
        o_ref[...] = (acc_ref[...] + b_ref[...]).astype(o_ref.dtype)


def _mm_bias_noacc_kernel(x_ref, w_ref, b_ref, o_ref):
    # Single K step: no f32 VMEM accumulator round-trip, no pl.when branches.
    x = x_ref[...]
    w = w_ref[...]
    if x.dtype != w.dtype:
        x = x.astype(w.dtype)
    o_ref[...] = (jnp.dot(x, w, preferred_element_type=jnp.float32)
                  + b_ref[...]).astype(o_ref.dtype)


# ----------------------------------------------------------------------------
# One-time parameter preparation (call once, reuse across forward steps)
# ----------------------------------------------------------------------------
class GroupedLinearConfig(NamedTuple):
    groups: int        # G
    group_in: int      # C_g
    group_out: int     # O_g
    pack: int          # P groups packed per block-diagonal super-group
    n_super: int       # S = G // P
    interleaved: bool  # True -> kernel output is already in PyTorch o*G+g order


def _choose_pack(G, C_g, O_g, mxu):
    """How many groups to pack per block-diagonal super-group."""
    # Per-group dims already MXU/layout friendly: no packing needed.
    if C_g % 128 == 0 and O_g % 128 == 0:
        return 1
    divs = [d for d in range(1, G + 1) if G % d == 0]
    # Layout-legal partial packs (packed K/N extents must be 128-aligned so
    # per-super-group BlockSpec tiles are valid), with K extent near MXU width.
    good = [d for d in divs
            if d < G
            and d * C_g % 128 == 0 and d * O_g % 128 == 0
            and d * C_g <= max(2 * mxu, 128)]
    if good:
        within = [d for d in good if d * C_g <= mxu]
        return max(within) if within else min(good)
    # No legal partial pack: collapse to one dense block (S == 1, always legal).
    # TODO(synk): for very large G with unaligned per-group dims this inflates
    # weight FLOPs/bytes by G; a dedicated 3-D grouped path would avoid it.
    return G


def prepare_grouped_linear(weight, bias, groups, *, compute_dtype=None):
    """Cacheable parameter prep: returns (w_prep, bias_prep, cfg).

    w_prep:   (S, P*C_g, P*O_g) block-diagonal super-group weights (already
              transposed so the kernel needs no `.T`; for S == 1 the PyTorch
              o*G+g interleave is folded into the columns).
    bias_prep:(1, out_features) f32, in the kernel's internal output layout.
    cfg:      static metadata (hashable) for grouped_linear_forward.
    """
    G, O_g, C_g = weight.shape
    assert groups == G
    out_f = G * O_g
    wdt = compute_dtype or weight.dtype
    _, mxu, _ = _chip_info()

    P = _choose_pack(G, C_g, O_g, mxu)
    S = G // P
    interleaved = (S == 1)

    w4 = weight.reshape(S, P, O_g, C_g)                      # [s, p, o, c]
    if P == 1:
        w_prep = jnp.transpose(w4[:, 0], (0, 2, 1))          # (S, C_g, O_g)
    else:
        eye = jnp.eye(P, dtype=weight.dtype)
        if interleaved:
            # columns ordered o*G + g  (PyTorch flat order, no post-transpose)
            blk = jnp.einsum('spoc,pq->spcoq', w4, eye)
            w_prep = blk.reshape(S, P * C_g, O_g * P)
        else:
            # columns ordered g*O_g + o (group-major; interleaved later)
            blk = jnp.einsum('spoc,pq->spcqo', w4, eye)
            w_prep = blk.reshape(S, P * C_g, P * O_g)
    w_prep = w_prep.astype(wdt)

    if interleaved:
        bias_prep = bias.reshape(1, out_f).astype(jnp.float32)
    else:
        # group-major internal layout: column g*O_g + o carries bias[o*G + g]
        bias_prep = bias.reshape(O_g, G).T.reshape(1, out_f).astype(jnp.float32)

    cfg = GroupedLinearConfig(G, C_g, O_g, P, S, interleaved)
    return w_prep, bias_prep, cfg


# ----------------------------------------------------------------------------
# Forward
# ----------------------------------------------------------------------------
def grouped_linear_forward(x, w_prep, bias_prep, cfg, *, interleave_output=True):
    """out[b, o*G + g] = sum_c x[b, g*C_g + c] * weight[g, o, c] + bias[o*G+g]."""
    B, in_f = x.shape
    S, Kg, Ng = w_prep.shape
    out_f = S * Ng
    assert in_f == S * Kg
    assert S == cfg.n_super
    out_dtype = x.dtype

    vmem, _, num_tc = _chip_info()
    vmem_budget = max(16 << 20, int(vmem * 0.45))      # ~28 MiB v7x, ~57 MiB v6e
    x_b = np.dtype(x.dtype).itemsize
    w_b = np.dtype(w_prep.dtype).itemsize
    o_b = np.dtype(out_dtype).itemsize

    tm, tk, tn = _choose_tiles(B, Kg, Ng, x_b, w_b, o_b,
                               vmem_budget, num_tc, S)
    nbm, nbn, nbk = B // tm, Ng // tn, Kg // tk
    grid = (S, nbm, nbn, nbk)
    k_per_s = nbk
    n_per_s = nbn

    in_specs = [
        # x indexed in its native (B, in_f) layout: group/super-group columns
        # are selected directly by the index_map (no wrapper transpose).
        pl.BlockSpec((tm, tk), lambda s, i, j, k: (i, s * k_per_s + k)),
        # weight: one super-group's (Kg, Ng) block; leading dim squeezed.
        pl.BlockSpec((None, tk, tn), lambda s, i, j, k: (s, k, j)),
        # bias in the kernel's internal output layout.
        pl.BlockSpec((1, tn), lambda s, i, j, k: (0, s * n_per_s + j)),
    ]
    out_spec = pl.BlockSpec((tm, tn), lambda s, i, j, k: (i, s * n_per_s + j))

    if nbk == 1:
        kernel, scratch = _mm_bias_noacc_kernel, []
    else:
        kernel, scratch = _mm_bias_acc_kernel, [pltpu.VMEM((tm, tn), jnp.float32)]

    ws = (2 * (tm * tk * x_b + tk * tn * w_b + tn * 4)
          + 2 * tm * tn * o_b + (tm * tn * 4 if nbk > 1 else 0))
    vmem_limit = int(min(max(vmem - (8 << 20), 16 << 20),
                         max(ws + (4 << 20), 16 << 20)))

    out = pl.pallas_call(
        kernel,
        out_shape=jax.ShapeDtypeStruct((B, out_f), out_dtype),
        grid_spec=pltpu.PrefetchScalarGridSpec(
            num_scalar_prefetch=0,
            grid=grid,
            in_specs=in_specs,
            out_specs=out_spec,
            scratch_shapes=scratch,
        ),
        compiler_params=pltpu.CompilerParams(
            dimension_semantics=("parallel", "parallel", "parallel", "arbitrary"),
            vmem_limit_bytes=vmem_limit,
        ),
    )(x, w_prep, bias_prep)

    if cfg.interleaved or not interleave_output:
        return out
    # Single XLA permutation: group-major (g*O_g + o) -> PyTorch (o*G + g).
    # Consumers that accept group-major can pass interleave_output=False.
    G, O_g = cfg.groups, cfg.group_out
    return jnp.transpose(out.reshape(B, G, O_g), (0, 2, 1)).reshape(B, out_f)


def grouped_linear(x, weight, bias, groups, *, compute_dtype=None):
    """Convenience wrapper. For real use, call prepare_grouped_linear once and
    reuse (the prep re-materializes weight layouts)."""
    w_prep, b_prep, cfg = prepare_grouped_linear(weight, bias, groups,
                                                 compute_dtype=compute_dtype)
    return grouped_linear_forward(x, w_prep, b_prep, cfg)


# ----------------------------------------------------------------------------
# Init + reference (mirror the PyTorch module)
# ----------------------------------------------------------------------------
def init_params(key, in_features, out_features, groups):
    G = groups
    C_g = in_features // G
    O_g = out_features // G
    k_w, k_b = jax.random.split(key)
    w_bound = 1.0 / math.sqrt(O_g * C_g)     # kaiming_uniform_(a=sqrt(5)) bound
    weight = jax.random.uniform(k_w, (G, O_g, C_g), jnp.float32, -w_bound, w_bound)
    b_bound = 1.0 / math.sqrt(out_features)
    bias = jax.random.uniform(k_b, (out_features,), jnp.float32, -b_bound, b_bound)
    return weight, bias


def _reference(x, weight, bias):
    B = x.shape[0]
    G, O_g, C_g = weight.shape
    out = jnp.einsum('bgc,goc->bog', x.reshape(B, G, C_g), weight)
    return out.reshape(B, -1) + bias


def _run_config(key, B, in_f, out_f, G, compute_dtype, atol, rtol):
    k1, k2 = jax.random.split(key)
    x = jax.random.normal(k1, (B, in_f), jnp.float32)
    w, b = init_params(k2, in_f, out_f, G)
    # One-time prep (cached); forward jitted with static config.
    w_prep, b_prep, cfg = prepare_grouped_linear(w, b, G, compute_dtype=compute_dtype)
    fwd = jax.jit(grouped_linear_forward, static_argnums=(3,))
    out = jax.block_until_ready(fwd(x, w_prep, b_prep, cfg))
    ref = _reference(x, w, b)
    assert out.shape == (B, out_f)
    assert jnp.allclose(out, ref, atol=atol, rtol=rtol), \
        f"mismatch: B={B} in={in_f} out={out_f} G={G}"


if __name__ == "__main__":
    key = jax.random.PRNGKey(0)
    ka, kb, kc, kd = jax.random.split(key, 4)

    # A: tiny groups, small G -> single dense block (S=1), interleave folded.
    _run_config(ka, B=8, in_f=64, out_f=64, G=4,
                compute_dtype=None, atol=1e-5, rtol=1e-5)

    # B: tiny groups, large G -> partial packing (P ~= MXU_K/C_g), group axis
    #    in the grid, group-major kernel output + one final interleave.
    _run_config(kb, B=64, in_f=1024, out_f=1024, G=64,
                compute_dtype=None, atol=2e-4, rtol=2e-4)

    # C: MXU-sized groups -> grouped path (P=1), bf16 weights with in-kernel
    #    x cast, f32 accumulate + bias.
    _run_config(kc, B=32, in_f=2048, out_f=512, G=2,
                compute_dtype=jnp.bfloat16, atol=1e-2, rtol=5e-2)

    # D: large per-group K -> K-tiled reduction with f32 VMEM accumulator.
    _run_config(kd, B=16, in_f=8192, out_f=256, G=2,
                compute_dtype=None, atol=2e-4, rtol=2e-4)

    print("KERNEL_OK")
</pallas_src>

<mosaic_0001>
module attributes {stable_mosaic.version = 11 : i64} {
  func.func @_mm_bias_noacc_kernel(%arg0: i32, %arg1: i32, %arg2: i32, %arg3: i32, %arg4: memref<8x64xf32, #tpu.memory_space<vmem>>, %arg5: memref<1x64x64xf32, #tpu.memory_space<vmem>>, %arg6: memref<1x64xf32, #tpu.memory_space<vmem>>, %arg7: memref<8x64xf32, #tpu.memory_space<vmem>>) attributes {dimension_semantics = [#tpu.dimension_semantics<parallel>, #tpu.dimension_semantics<parallel>, #tpu.dimension_semantics<parallel>, #tpu.dimension_semantics<arbitrary>], iteration_bounds = array<i64: 1, 1, 1, 1>, scalar_prefetch = 0 : i64, scratch_operands = 0 : i64, tpu.core_type = #tpu.core_type<tc>, window_params = [{transform_indices = @transform_0, window_bounds = array<i64: 8, 64>}, {transform_indices = @transform_1, window_bounds = array<i64: 1, 64, 64>}, {transform_indices = @transform_2, window_bounds = array<i64: 1, 64>}, {transform_indices = @transform_3, window_bounds = array<i64: 8, 64>}]} {
    %c0 = arith.constant 0 : index
    %c0_0 = arith.constant 0 : index
    %0 = vector.load %arg4[%c0, %c0_0] : memref<8x64xf32, #tpu.memory_space<vmem>>, vector<8x64xf32>
    %c0_1 = arith.constant 0 : index
    %c0_2 = arith.constant 0 : index
    %c0_3 = arith.constant 0 : index
    %1 = vector.load %arg5[%c0_1, %c0_2, %c0_3] : memref<1x64x64xf32, #tpu.memory_space<vmem>>, vector<1x64x64xf32>
    %2 = vector.shape_cast %1 : vector<1x64x64xf32> to vector<64x64xf32>
    %cst = arith.constant dense<0.000000e+00> : vector<8x64xf32>
    %3 = tpu.matmul %0, %2, %cst {dimension_numbers = #tpu.dot_dimension_numbers<[1], [0], [0], [1], [0, 0, 1, 1], [], []>} : vector<8x64xf32>, vector<64x64xf32>, vector<8x64xf32> -> vector<8x64xf32>
    %c0_4 = arith.constant 0 : index
    %c0_5 = arith.constant 0 : index
    %4 = vector.load %arg6[%c0_4, %c0_5] : memref<1x64xf32, #tpu.memory_space<vmem>>, vector<1x64xf32>
    %5 = vector.broadcast %4 : vector<1x64xf32> to vector<8x64xf32>
    %6 = arith.addf %3, %5 : vector<8x64xf32>
    %c0_6 = arith.constant 0 : index
    %c0_7 = arith.constant 0 : index
    %7 = vector.load %arg7[%c0_6, %c0_7] : memref<8x64xf32, #tpu.memory_space<vmem>>, vector<8x64xf32>
    tpu.vector_store %arg7[%c0_6, %c0_7], %6 {strides = array<i32>} : memref<8x64xf32, #tpu.memory_space<vmem>>, vector<8x64xf32>,
    return
  }
  func.func @transform_0(%arg0: i32, %arg1: i32, %arg2: i32, %arg3: i32) -> (i32, i32) {
    %c1_i32 = arith.constant 1 : i32
    %0 = arith.muli %arg0, %c1_i32 : i32
    %1 = arith.addi %0, %arg3 : i32
    %c0_i32 = arith.constant 0 : i32
    return %arg1, %1 : i32, i32
  }
  func.func @transform_1(%arg0: i32, %arg1: i32, %arg2: i32, %arg3: i32) -> (i32, i32, i32) {
    %c0_i32 = arith.constant 0 : i32
    return %arg0, %arg3, %arg2 : i32, i32, i32
  }
  func.func @transform_2(%arg0: i32, %arg1: i32, %arg2: i32, %arg3: i32) -> (i32, i32) {
    %c1_i32 = arith.constant 1 : i32
    %0 = arith.muli %arg0, %c1_i32 : i32
    %1 = arith.addi %0, %arg2 : i32
    %c0_i32 = arith.constant 0 : i32
    %c0_i32_0 = arith.constant 0 : i32
    return %c0_i32, %1 : i32, i32
  }
  func.func @transform_3(%arg0: i32, %arg1: i32, %arg2: i32, %arg3: i32) -> (i32, i32) {
    %c1_i32 = arith.constant 1 : i32
    %0 = arith.muli %arg0, %c1_i32 : i32
    %1 = arith.addi %0, %arg2 : i32
    %c0_i32 = arith.constant 0 : i32
    return %arg1, %1 : i32, i32
  }
}

</mosaic_0001>

<llo_original>
// kernel: grouped_linear_forward.1
$region0: #{grouped_linear_forward.1}
  #allocation0 [shape = 'u32[]', space=smem, size = 0x4, offset = 0x4, fixed_abs, tag = 'smem constant byte address 0x4 - core index']
  #allocation1 [shape = 'u32[144,128]{1,0:T(1,128)}', space=vmem, size = 0x12000, scoped, tag = 'internal scratch']
  %s0 = inlined_call_operand.hbm [shape: f32[8,64], index: 0, kind: input, shape index: {}]
  %s1 = inlined_call_operand.hbm [shape: f32[1,64,64], index: 1, kind: input, shape index: {}]
  %s2 = inlined_call_operand.vmem [shape: f32[1,64], index: 2, kind: input, shape index: {}]
  %s3 = inlined_call_operand.hbm [shape: f32[8,64], index: 3, kind: output, shape index: {}]
  %s4 = sld [smem:[#allocation0]]
  $region30: #{grouped_linear_forward.1} parent=0
    _
  %s6 = ssub.s32 1, %s4
  %s7 = scalar_select 0, %s6, %s4
  $region1: #{grouped_linear_forward.1} parent=0
    #allocation2 [shape = 'u8[4096]{0}', space=vmem, size = 0x1000, scoped, tag = 'input window, operand 0, single buffered']
    #allocation3 [shape = 's32[1]{0}', space=sflag, size = 0x4, scoped, tag = 'scoped memory for grouped_linear_forward.1']
    #allocation4 [shape = 's32[1]{0}', space=sflag, size = 0x4, scoped, tag = 'scoped memory for grouped_linear_forward.1']
    #allocation5 [shape = 'u8[32768]{0}', space=vmem, size = 0x8000, scoped, tag = 'input window, operand 1, single buffered']
    #allocation6 [shape = 's32[1]{0}', space=sflag, size = 0x4, scoped, tag = 'scoped memory for grouped_linear_forward.1']
    #allocation7 [shape = 'u8[4096]{0}', space=vmem, size = 0x1000, scoped, tag = 'output window, operand 0, single buffered']
    %8 = vsyncpa [#allocation3], 0
    %9 = vsyncpa [#allocation6], 0
    %10 = vsyncpa [#allocation4], 0
    // Predicated region
    $region2: #{grouped_linear_forward.1} parent=1 // pred_check
      _
    $region3: #{grouped_linear_forward.1} parent=1 // pred_check_branch
      %12 = sbr.rel (0) target = $region5
    $region4: #{grouped_linear_forward.1} parent=1 // pred_region
      %s13 = sadd.s32 0, 0
      %s15 = ssub.s32 128, 128
      %16 = vsyncadd [#allocation3], %s15
      %s17 = smul.addr %s13, 128
      %s18 = scalar_lea.hbm %s0, %s17
      %s20 = sshll.u32 [#allocation2], 4
      %s21 = int_to_ptr.vmem [resolvable:$true] %s20
      %23 = dma.hbm_to_vmem [thread:$0]  %s18, 128, %s21, [#allocation3]
    $region5: #{grouped_linear_forward.1} parent=1 // pred_fallthru
      _
    // Predicated region
    $region6: #{grouped_linear_forward.1} parent=1 // pred_check
      _
    $region7: #{grouped_linear_forward.1} parent=1 // pred_check_branch
      %25 = sbr.rel (0) target = $region9
    $region8: #{grouped_linear_forward.1} parent=1 // pred_region
      %s27 = ssub.s32 1024, 1024
      %28 = vsyncadd [#allocation6], %s27
      %s29 = sshll.u32 [#allocation5], 4
      %s30 = int_to_ptr.vmem [resolvable:$true] %s29
      %35 = dma.hbm_to_vmem [thread:$0]  %s1, 1024, %s30, [#allocation6], 128, 128, 8
    $region9: #{grouped_linear_forward.1} parent=1 // pred_fallthru
      _
    // Predicated region
    $region10: #{grouped_linear_forward.1} parent=1 // pred_check
      _
    $region11: #{grouped_linear_forward.1} parent=1 // pred_check_branch
      %37 = sbr.rel (0) target = $region13
    $region12: #{grouped_linear_forward.1} parent=1 // pred_region
      %s38 = sadd.s32 0, 0
      %p39 = scmp.lt.s32.totalorder %s38, 0
      %s40 = scalar_select %p39, %s38, 0
      %s41 = scalar_lea.vmem %s2, %s40
      %s42 = sadd.s32 0, 0
    $region13: #{grouped_linear_forward.1} parent=1 // pred_fallthru
      _
    // Predicated region
    $region14: #{grouped_linear_forward.1} parent=1 // pred_check
      _
    $region15: #{grouped_linear_forward.1} parent=1 // pred_check_branch
      %44 = sbr.rel (0) target = $region17
    $region16: #{grouped_linear_forward.1} parent=1 // pred_region
      %45 = dma.done [#allocation3], 128
    $region17: #{grouped_linear_forward.1} parent=1 // pred_fallthru
      _
    // Predicated region
    $region18: #{grouped_linear_forward.1} parent=1 // pred_check
      _
    $region19: #{grouped_linear_forward.1} parent=1 // pred_check_branch
      %47 = sbr.rel (0) target = $region21
    $region20: #{grouped_linear_forward.1} parent=1 // pred_region
      %48 = dma.done [#allocation6], 1024
    $region21: #{grouped_linear_forward.1} parent=1 // pred_fallthru
      _
    %s49 = sadd.s32 0, 0
    %p50 = scmp.lt.s32.totalorder %s49, 0
    %s51 = scalar_select %p50, %s49, 0
    %s52 = scalar_lea.vmem %s2, %s51
    %s53 = sadd.s32 0, 0
    %s54 = sadd.s32 0, 0
    %p55 = scmp.lt.s32.totalorder %s54, 0
    %s56 = scalar_select %p55, %s54, 0
    %s57 = scalar_lea.vmem %s2, %s56
    %s58 = sadd.s32 0, 0
    %s59 = sadd.s32 0, 0
    %v60 = vld [vmem:[#allocation2] sm:$0xff]
    %v61 = vld [vmem:[#allocation5] sm:$0xff]
    %v62 = vld [vmem:[#allocation5 + $0x8] sm:$0xff]
    %v63 = vld [vmem:[#allocation5 + $0x10] sm:$0xff]
    %v64 = vld [vmem:[#allocation5 + $0x18] sm:$0xff]
    %v65 = vld [vmem:[#allocation5 + $0x20] sm:$0xff]
    %v66 = vld [vmem:[#allocation5 + $0x28] sm:$0xff]
    %v67 = vld [vmem:[#allocation5 + $0x30] sm:$0xff]
    %v68 = vld [vmem:[#allocation5 + $0x38] sm:$0xff]
    %v69 = vld [vmem:[%s57] sm:$0x1]
    %v71 = vlaneseq
    %v72 = vshrl.u32 %v71, 7
    %v73 = vsub.s32 0, %v72
    %v74 = vrot.slane %v69, %v73
    %vm76 = vcmask 523264
    %v78 = vsel %vm76, %v60, 0
    %80 = vmatprep.subr.mxu0 0.0
    %81 = vmatpush1.msra.mxu0 %v61
    %82 = vmatprep.subr.mxu0 0.0
    %83 = vmatpush1.msra.mxu0 %v62
    %84 = vmatprep.subr.mxu0 0.0
    %85 = vmatpush1.msra.mxu0 %v63
    %86 = vmatprep.subr.mxu0 0.0
    %87 = vmatpush1.msra.mxu0 %v64
    %88 = vmatprep.subr.mxu0 0.0
    %89 = vmatpush1.msra.mxu0 %v65
    %90 = vmatprep.subr.mxu0 0.0
    %91 = vmatpush1.msra.mxu0 %v66
    %92 = vmatprep.subr.mxu0 0.0
    %93 = vmatpush1.msra.mxu0 %v67
    %94 = vmatprep.subr.mxu0 0.0
    %95 = vmatpush1.msra.mxu0 %v68
    %96 = vmatprep.subr.mxu0 0.0
    %97 = vmatpush1.msra.mxu0 0.0
    %98 = vmatprep.subr.mxu0 0.0
    %99 = vmatpush1.msra.mxu0 0.0
    %100 = vmatprep.subr.mxu0 0.0
    %101 = vmatpush1.msra.mxu0 0.0
    %102 = vmatprep.subr.mxu0 0.0
    %103 = vmatpush1.msra.mxu0 0.0
    %104 = vmatprep.subr.mxu0 0.0
    %105 = vmatpush1.msra.mxu0 0.0
    %106 = vmatprep.subr.mxu0 0.0
    %107 = vmatpush1.msra.mxu0 0.0
    %108 = vmatprep.subr.mxu0 0.0
    %109 = vmatpush1.msra.mxu0 0.0
    %110 = vmatprep.subr.mxu0 0.0
    %111 = vmatpush1.msra.mxu0 0.0
    %112 = vmatprep.subr.mxu0 0.0
    %113 = vmatpush1.msra.mxu0 0.0
    %114 = vmatprep.subr.mxu0 0.0
    %115 = vmatpush1.msra.mxu0 0.0
    %116 = vmatprep.subr.mxu0 0.0
    %117 = vmatpush1.msra.mxu0 0.0
    %118 = vmatprep.subr.mxu0 0.0
    %119 = vmatpush1.msra.mxu0 0.0
    %120 = vmatprep.subr.mxu0 0.0
    %121 = vmatpush1.msra.mxu0 0.0
    %122 = vmatprep.subr.mxu0 0.0
    %123 = vmatpush1.msra.mxu0 0.0
    %124 = vmatprep.subr.mxu0 0.0
    %125 = vmatpush1.msra.mxu0 0.0
    %126 = vmatprep.subr.mxu0 0.0
    %127 = vmatpush1.msra.mxu0 0.0
    %128 = vmatprep.subr.mxu0 0.0
    %129 = vmatpush1.msra.mxu0 0.0
    %130 = vmatprep.subr.mxu0 0.0
    %131 = vmatpush1.msra.mxu0 0.0
    %132 = vmatprep.subr.mxu0 0.0
    %133 = vmatpush1.msra.mxu0 0.0
    %134 = vmatprep.subr.mxu0 0.0
    %135 = vmatpush1.msra.mxu0 0.0
    %136 = vmatprep.subr.mxu0 0.0
    %137 = vmatpush1.msra.mxu0 0.0
    %138 = vmatprep.subr.mxu0 0.0
    %139 = vmatpush1.msra.mxu0 0.0
    %140 = vmatprep.subr.mxu0 0.0
    %141 = vmatpush1.msra.mxu0 0.0
    %142 = vmatprep.subr.mxu0 0.0
    %143 = vmatpush1.msra.mxu0 0.0
    %144 = vmatprep.mubr.f32.mxu0 0.0
    %145 = vmatmul.mubr.f32.gmra.mrb[0].mxu0 %v78
    %v146 = vpop.f32.mrb[0].mxu0
    %v147 = vadd.f32 %v74, %v146
    %v148 = vpop.f32.mrb[0].mxu0
    %149 = vdwg.mxu0
    %150 = vst.msk [vmem:[#allocation7] sm:$0xff] %vm76, %v147
    // Predicated region
    $region22: #{grouped_linear_forward.1} parent=1 // pred_check
      _
    $region23: #{grouped_linear_forward.1} parent=1 // pred_check_branch
      %152 = sbr.rel (0) target = $region25
    $region24: #{grouped_linear_forward.1} parent=1 // pred_region
      %s153 = sadd.s32 0, 0
      %s155 = ssub.s32 128, 128
      %156 = vsyncadd [#allocation4], %s155
      %s157 = smul.addr %s153, 128
      %s158 = scalar_lea.hbm %s3, %s157
      %s160 = sshll.u32 [#allocation7], 4
      %s161 = int_to_ptr.vmem [resolvable:$true] %s160
      %163 = dma.vmem_to_hbm [thread:$0]  %s161, 128, %s158, [#allocation4]
    $region25: #{grouped_linear_forward.1} parent=1 // pred_fallthru
      _
    // Predicated region
    $region26: #{grouped_linear_forward.1} parent=1 // pred_check
      _
    $region27: #{grouped_linear_forward.1} parent=1 // pred_check_branch
      %165 = sbr.rel (0) target = $region29
    $region28: #{grouped_linear_forward.1} parent=1 // pred_region
      %166 = dma.done [#allocation4], 128
    $region29: #{grouped_linear_forward.1} parent=1 // pred_fallthru
      _
    %167 = vsyncpa [#allocation3], 1
    %168 = vsyncpa [#allocation6], 1
    %169 = vsyncpa [#allocation4], 1

</llo_original>
